<compile_context>
chip_gen: v5e
topology: v5e:2x2
jax: 0.10.0
libtpu: 0.0.40
codegen_flags: <defaults>
</compile_context>

<pallas_src>
import functools

import jax
import jax.numpy as jnp
from jax.experimental import pallas as pl
from jax.experimental.pallas import tpu as pltpu


def _multi_ae_kernel(x_ref,                       # (TB, K*D_in)
                     ew1_ref, eb1_ref,            # (K*D_in, K*L), (1, K*L)  block-diag
                     ew2_ref, eb2_ref,            # (K*L,   K*L), (1, K*L)  block-diag
                     ew3_ref, eb3_ref,            # (K*L,   K*L), (1, K*L)  block-diag
                     fw1_ref, fb1_ref,            # (L, L), (1, L)
                     fw2_ref, fb2_ref,            # (L, L), (1, L)
                     fw3_ref, fb3_ref,            # (L, L_out), (1, L_out)
                     dwf_ref, dbf_ref,            # (L_out, N*D_in), (1, N*D_in)  fused
                     out_ref):                    # (TB, N*D_in)
    f32 = jnp.float32
    L = fw1_ref.shape[0]
    KL = ew3_ref.shape[1]
    K = KL // L

    x = x_ref[...]                                                   # (TB, K*D_in)

    # ---- all K encoders at once via block-diagonal weights (3 matmuls total)
    h = jax.nn.sigmoid(
        jnp.dot(x, ew1_ref[...], preferred_element_type=f32) + eb1_ref[...])
    h = jnp.maximum(
        jnp.dot(h, ew2_ref[...], preferred_element_type=f32) + eb2_ref[...], 0.0)
    h = jnp.dot(h, ew3_ref[...], preferred_element_type=f32) + eb3_ref[...]  # (TB, K*L)

    # ---- view fusion: cat(dim=1) then max(dim=1) == elementwise max over the
    #      K lane-segments of h (static slices, unrolled; K is tiny & static).
    fused = h[:, 0:L]
    for k in range(1, K):
        fused = jnp.maximum(fused, h[:, k * L:(k + 1) * L])          # (TB, L)

    # ---- fusion MLP
    z = jax.nn.sigmoid(
        jnp.dot(fused, fw1_ref[...], preferred_element_type=f32) + fb1_ref[...])
    z = jax.nn.sigmoid(
        jnp.dot(z, fw2_ref[...], preferred_element_type=f32) + fb2_ref[...])
    z = jnp.dot(z, fw3_ref[...], preferred_element_type=f32) + fb3_ref[...]  # (TB, L_out)

    # ---- all N decoders fused into one lane-dense matmul / one wide store
    out_ref[...] = (jnp.dot(z, dwf_ref[...], preferred_element_type=f32)
                    + dbf_ref[...]).astype(out_ref.dtype)


def prepare_fused_params(params, indices):
    """One-time (outside the hot path) fusion of the per-view / per-decoder weights."""
    idx = tuple(indices)
    dec_w = params["dec_w"]                      # (N, L_out, D_in), stored (in, out)
    N, L_out, D_in = dec_w.shape
    bd = jax.scipy.linalg.block_diag

    fused = {
        # block-diagonal encoder stacks for the selected views
        "ew1": bd(*[params["enc_w1"][i] for i in idx]),              # (K*D_in, K*L)
        "eb1": jnp.concatenate([params["enc_b1"][i] for i in idx], axis=-1),
        "ew2": bd(*[params["enc_w2"][i] for i in idx]),              # (K*L, K*L)
        "eb2": jnp.concatenate([params["enc_b2"][i] for i in idx], axis=-1),
        "ew3": bd(*[params["enc_w3"][i] for i in idx]),              # (K*L, K*L)
        "eb3": jnp.concatenate([params["enc_b3"][i] for i in idx], axis=-1),
        # fusion MLP as-is
        "fw1": params["fw1"], "fb1": params["fb1"],
        "fw2": params["fw2"], "fb2": params["fb2"],
        "fw3": params["fw3"], "fb3": params["fb3"],
        # all-N decoders fused into one lane-dense matrix
        "dwf": jnp.transpose(dec_w, (1, 0, 2)).reshape(L_out, N * D_in),
        "dbf": params["dec_b"].reshape(1, N * D_in),
    }
    return fused


@functools.partial(jax.jit, static_argnames=("indices",))
def multi_autoencoder_forward(multi_x, fused_params, indices):
    """multi_x: (N_views, B, 1, D_in) float32. Returns (N, B, 1, D_in)."""
    idx = tuple(indices)
    K = len(idx)
    _, B, _, D_in = multi_x.shape
    p = fused_params
    L = p["fw1"].shape[0]
    L_out = p["fw3"].shape[1]
    N_dec = p["dbf"].shape[1] // D_in

    # glue: select the active views and lane-concat them -> (B, K*D_in)
    x_cat = jnp.concatenate([multi_x[i, :, 0, :] for i in idx], axis=-1)

    # pad batch to a sublane-aligned tile; tile the batch as a grid axis so v7x
    # can shard it across its two TensorCores (harmless length-1 grid on v5e/v6e).
    B_pad = ((B + 7) // 8) * 8
    TB = min(B_pad, 256)
    B_pad = ((B_pad + TB - 1) // TB) * TB
    if B_pad != B:
        x_cat = jnp.pad(x_cat, ((0, B_pad - B), (0, 0)))
    grid = (B_pad // TB,)

    def full_block(arr):
        shp = tuple(arr.shape)
        return pl.BlockSpec(shp, lambda b, _s=shp: (0,) * len(_s))

    in_specs = [
        pl.BlockSpec((TB, K * D_in), lambda b: (b, 0)),
        full_block(p["ew1"]), full_block(p["eb1"]),
        full_block(p["ew2"]), full_block(p["eb2"]),
        full_block(p["ew3"]), full_block(p["eb3"]),
        full_block(p["fw1"]), full_block(p["fb1"]),
        full_block(p["fw2"]), full_block(p["fb2"]),
        full_block(p["fw3"]), full_block(p["fb3"]),
        full_block(p["dwf"]), full_block(p["dbf"]),
    ]
    out_spec = pl.BlockSpec((TB, N_dec * D_in), lambda b: (b, 0))

    # advisory cost estimate so XLA schedules surrounding ops around this call
    flops = 2 * B_pad * (
        (K * D_in) * (K * L)          # enc layer 1
        + 2 * (K * L) * (K * L)       # enc layers 2, 3
        + 2 * L * L                   # fusion fc1, fc2
        + L * L_out                   # fusion fc3
        + L_out * (N_dec * D_in))     # fused decoders
    transcendentals = B_pad * (K * L + 2 * L)      # sigmoids
    weight_keys = ("ew1", "eb1", "ew2", "eb2", "ew3", "eb3",
                   "fw1", "fb1", "fw2", "fb2", "fw3", "fb3", "dwf", "dbf")
    bytes_accessed = 4 * (x_cat.size + sum(p[k].size for k in weight_keys)
                          + B_pad * N_dec * D_in)

    out = pl.pallas_call(
        _multi_ae_kernel,
        out_shape=jax.ShapeDtypeStruct((B_pad, N_dec * D_in), jnp.float32),
        grid=grid,
        in_specs=in_specs,
        out_specs=out_spec,
        compiler_params=pltpu.CompilerParams(
            dimension_semantics=("parallel",)),
        cost_estimate=pl.CostEstimate(
            flops=int(flops),
            transcendentals=int(transcendentals),
            bytes_accessed=int(bytes_accessed)),
    )(x_cat,
      p["ew1"], p["eb1"], p["ew2"], p["eb2"], p["ew3"], p["eb3"],
      p["fw1"], p["fb1"], p["fw2"], p["fb2"], p["fw3"], p["fb3"],
      p["dwf"], p["dbf"])

    out = out[:B].reshape(B, N_dec, D_in)                       # (B, N, D_in)
    return jnp.transpose(out, (1, 0, 2))[:, :, None, :]         # (N, B, 1, D_in)


def _reference_forward(multi_x, params, indices):
    """Pure-JAX reference mirroring the PyTorch module semantics."""
    enc_outs = []
    for i in indices:
        x = multi_x[i, :, 0, :]
        h = jax.nn.sigmoid(x @ params["enc_w1"][i] + params["enc_b1"][i][0])
        h = jnp.maximum(h @ params["enc_w2"][i] + params["enc_b2"][i][0], 0.0)
        h = h @ params["enc_w3"][i] + params["enc_b3"][i][0]
        enc_outs.append(h)
    fused = enc_outs[0]
    for h in enc_outs[1:]:
        fused = jnp.maximum(fused, h)   # cat(dim=1) then max(dim=1) == elementwise max
    z = jax.nn.sigmoid(fused @ params["fw1"] + params["fb1"][0])
    z = jax.nn.sigmoid(z @ params["fw2"] + params["fb2"][0])
    z = z @ params["fw3"] + params["fb3"][0]
    outs = [z @ params["dec_w"][i] + params["dec_b"][i][0]
            for i in range(params["dec_w"].shape[0])]
    return jnp.stack(outs, axis=0)[:, :, None, :]


def init_params(key, input_size, latent_size, output_size, N):
    # deterministic synthetic init (weights stored as (in, out))
    ks = jax.random.split(key, 20)
    u = lambda k, shape, fan_in: jax.random.uniform(
        k, shape, jnp.float32, -1.0 / jnp.sqrt(fan_in), 1.0 / jnp.sqrt(fan_in))
    return {
        "enc_w1": u(ks[0], (N, input_size, latent_size), input_size),
        "enc_b1": u(ks[1], (N, 1, latent_size), input_size),
        "enc_w2": u(ks[2], (N, latent_size, latent_size), latent_size),
        "enc_b2": u(ks[3], (N, 1, latent_size), latent_size),
        "enc_w3": u(ks[4], (N, latent_size, latent_size), latent_size),
        "enc_b3": u(ks[5], (N, 1, latent_size), latent_size),
        "fw1": u(ks[6], (latent_size, latent_size), latent_size),
        "fb1": u(ks[7], (1, latent_size), latent_size),
        "fw2": u(ks[8], (latent_size, latent_size), latent_size),
        "fb2": u(ks[9], (1, latent_size), latent_size),
        "fw3": u(ks[10], (latent_size, output_size), latent_size),
        "fb3": u(ks[11], (1, output_size), latent_size),
        "dec_w": u(ks[12], (N, output_size, input_size), output_size),
        "dec_b": u(ks[13], (N, 1, input_size), output_size),
    }


if __name__ == "__main__":
    # small shapes consistent with the module's forward
    # (output_size must equal latent_size, as the PyTorch module requires)
    B, D_in, L, N = 8, 4, 32, 3
    indices = (0, 2)

    key = jax.random.PRNGKey(0)
    k_x, k_p = jax.random.split(key)
    multi_x = jax.random.normal(k_x, (N, B, 1, D_in), jnp.float32)
    params = init_params(k_p, D_in, L, L, N)

    # one-time weight fusion (hoisted out of the per-call path; indices are static)
    fused_params = prepare_fused_params(params, indices)

    out = multi_autoencoder_forward(multi_x, fused_params, indices)
    out = jax.block_until_ready(out)

    ref = _reference_forward(multi_x, params, indices)
    assert out.shape == (N, B, 1, D_in)
    assert jnp.allclose(out, ref, atol=1e-5, rtol=1e-5), "mismatch vs reference"

    print("KERNEL_OK")
</pallas_src>

<mosaic_0001>
module attributes {stable_mosaic.version = 11 : i64} {
  func.func @_multi_ae_kernel(%arg0: i32, %arg1: memref<8x8xf32, #tpu.memory_space<vmem>>, %arg2: memref<8x64xf32, #tpu.memory_space<vmem>>, %arg3: memref<1x64xf32, #tpu.memory_space<vmem>>, %arg4: memref<64x64xf32, #tpu.memory_space<vmem>>, %arg5: memref<1x64xf32, #tpu.memory_space<vmem>>, %arg6: memref<64x64xf32, #tpu.memory_space<vmem>>, %arg7: memref<1x64xf32, #tpu.memory_space<vmem>>, %arg8: memref<32x32xf32, #tpu.memory_space<vmem>>, %arg9: memref<1x32xf32, #tpu.memory_space<vmem>>, %arg10: memref<32x32xf32, #tpu.memory_space<vmem>>, %arg11: memref<1x32xf32, #tpu.memory_space<vmem>>, %arg12: memref<32x32xf32, #tpu.memory_space<vmem>>, %arg13: memref<1x32xf32, #tpu.memory_space<vmem>>, %arg14: memref<32x12xf32, #tpu.memory_space<vmem>>, %arg15: memref<1x12xf32, #tpu.memory_space<vmem>>, %arg16: memref<8x12xf32, #tpu.memory_space<vmem>>) attributes {dimension_semantics = [#tpu.dimension_semantics<parallel>], iteration_bounds = array<i64: 1>, scalar_prefetch = 0 : i64, scratch_operands = 0 : i64, tpu.core_type = #tpu.core_type<tc>, window_params = [{transform_indices = @transform_0, window_bounds = array<i64: 8, 8>}, {pipeline_mode = #tpu.pipeline_mode<synchronous>, transform_indices = @transform_1, window_bounds = array<i64: 8, 64>}, {pipeline_mode = #tpu.pipeline_mode<synchronous>, transform_indices = @transform_2, window_bounds = array<i64: 1, 64>}, {pipeline_mode = #tpu.pipeline_mode<synchronous>, transform_indices = @transform_3, window_bounds = array<i64: 64, 64>}, {pipeline_mode = #tpu.pipeline_mode<synchronous>, transform_indices = @transform_4, window_bounds = array<i64: 1, 64>}, {pipeline_mode = #tpu.pipeline_mode<synchronous>, transform_indices = @transform_5, window_bounds = array<i64: 64, 64>}, {pipeline_mode = #tpu.pipeline_mode<synchronous>, transform_indices = @transform_6, window_bounds = array<i64: 1, 64>}, {pipeline_mode = #tpu.pipeline_mode<synchronous>, transform_indices = @transform_7, window_bounds = array<i64: 32, 32>}, {pipeline_mode = #tpu.pipeline_mode<synchronous>, transform_indices = @transform_8, window_bounds = array<i64: 1, 32>}, {pipeline_mode = #tpu.pipeline_mode<synchronous>, transform_indices = @transform_9, window_bounds = array<i64: 32, 32>}, {pipeline_mode = #tpu.pipeline_mode<synchronous>, transform_indices = @transform_10, window_bounds = array<i64: 1, 32>}, {pipeline_mode = #tpu.pipeline_mode<synchronous>, transform_indices = @transform_11, window_bounds = array<i64: 32, 32>}, {pipeline_mode = #tpu.pipeline_mode<synchronous>, transform_indices = @transform_12, window_bounds = array<i64: 1, 32>}, {pipeline_mode = #tpu.pipeline_mode<synchronous>, transform_indices = @transform_13, window_bounds = array<i64: 32, 12>}, {pipeline_mode = #tpu.pipeline_mode<synchronous>, transform_indices = @transform_14, window_bounds = array<i64: 1, 12>}, {transform_indices = @transform_15, window_bounds = array<i64: 8, 12>}]} {
    %c0 = arith.constant 0 : index
    %c0_0 = arith.constant 0 : index
    %0 = vector.load %arg1[%c0, %c0_0] : memref<8x8xf32, #tpu.memory_space<vmem>>, vector<8x8xf32>
    %c0_1 = arith.constant 0 : index
    %c0_2 = arith.constant 0 : index
    %1 = vector.load %arg2[%c0_1, %c0_2] : memref<8x64xf32, #tpu.memory_space<vmem>>, vector<8x64xf32>
    %cst = arith.constant dense<0.000000e+00> : vector<8x64xf32>
    %2 = tpu.matmul %0, %1, %cst {dimension_numbers = #tpu.dot_dimension_numbers<[1], [0], [0], [1], [0, 0, 1, 1], [], []>} : vector<8x8xf32>, vector<8x64xf32>, vector<8x64xf32> -> vector<8x64xf32>
    %c0_3 = arith.constant 0 : index
    %c0_4 = arith.constant 0 : index
    %3 = vector.load %arg3[%c0_3, %c0_4] : memref<1x64xf32, #tpu.memory_space<vmem>>, vector<1x64xf32>
    %4 = vector.broadcast %3 : vector<1x64xf32> to vector<8x64xf32>
    %5 = arith.addf %2, %4 : vector<8x64xf32>
    %6 = arith.negf %5 : vector<8x64xf32>
    %7 = math.exp %6 : vector<8x64xf32>
    %cst_5 = arith.constant 1.000000e+00 : f32
    %8 = vector.broadcast %cst_5 : f32 to vector<8x64xf32>
    %9 = arith.addf %8, %7 : vector<8x64xf32>
    %10 = arith.divf %8, %9 : vector<8x64xf32>
    %c0_6 = arith.constant 0 : index
    %c0_7 = arith.constant 0 : index
    %11 = vector.load %arg4[%c0_6, %c0_7] : memref<64x64xf32, #tpu.memory_space<vmem>>, vector<64x64xf32>
    %cst_8 = arith.constant dense<0.000000e+00> : vector<8x64xf32>
    %12 = tpu.matmul %10, %11, %cst_8 {dimension_numbers = #tpu.dot_dimension_numbers<[1], [0], [0], [1], [0, 0, 1, 1], [], []>} : vector<8x64xf32>, vector<64x64xf32>, vector<8x64xf32> -> vector<8x64xf32>
    %c0_9 = arith.constant 0 : index
    %c0_10 = arith.constant 0 : index
    %13 = vector.load %arg5[%c0_9, %c0_10] : memref<1x64xf32, #tpu.memory_space<vmem>>, vector<1x64xf32>
    %14 = vector.broadcast %13 : vector<1x64xf32> to vector<8x64xf32>
    %15 = arith.addf %12, %14 : vector<8x64xf32>
    %cst_11 = arith.constant 0.000000e+00 : f32
    %16 = vector.broadcast %cst_11 : f32 to vector<8x64xf32>
    %17 = arith.maximumf %15, %16 : vector<8x64xf32>
    %c0_12 = arith.constant 0 : index
    %c0_13 = arith.constant 0 : index
    %18 = vector.load %arg6[%c0_12, %c0_13] : memref<64x64xf32, #tpu.memory_space<vmem>>, vector<64x64xf32>
    %cst_14 = arith.constant dense<0.000000e+00> : vector<8x64xf32>
    %19 = tpu.matmul %17, %18, %cst_14 {dimension_numbers = #tpu.dot_dimension_numbers<[1], [0], [0], [1], [0, 0, 1, 1], [], []>} : vector<8x64xf32>, vector<64x64xf32>, vector<8x64xf32> -> vector<8x64xf32>
    %c0_15 = arith.constant 0 : index
    %c0_16 = arith.constant 0 : index
    %20 = vector.load %arg7[%c0_15, %c0_16] : memref<1x64xf32, #tpu.memory_space<vmem>>, vector<1x64xf32>
    %21 = vector.broadcast %20 : vector<1x64xf32> to vector<8x64xf32>
    %22 = arith.addf %19, %21 : vector<8x64xf32>
    %23 = vector.extract_strided_slice %22 {offsets = [0, 0], sizes = [8, 32], strides = [1, 1]} : vector<8x64xf32> to vector<8x32xf32>
    %24 = vector.extract_strided_slice %22 {offsets = [0, 32], sizes = [8, 32], strides = [1, 1]} : vector<8x64xf32> to vector<8x32xf32>
    %25 = arith.maximumf %23, %24 : vector<8x32xf32>
    %c0_17 = arith.constant 0 : index
    %c0_18 = arith.constant 0 : index
    %26 = vector.load %arg8[%c0_17, %c0_18] : memref<32x32xf32, #tpu.memory_space<vmem>>, vector<32x32xf32>
    %cst_19 = arith.constant dense<0.000000e+00> : vector<8x32xf32>
    %27 = tpu.matmul %25, %26, %cst_19 {dimension_numbers = #tpu.dot_dimension_numbers<[1], [0], [0], [1], [0, 0, 1, 1], [], []>} : vector<8x32xf32>, vector<32x32xf32>, vector<8x32xf32> -> vector<8x32xf32>
    %c0_20 = arith.constant 0 : index
    %c0_21 = arith.constant 0 : index
    %28 = vector.load %arg9[%c0_20, %c0_21] : memref<1x32xf32, #tpu.memory_space<vmem>>, vector<1x32xf32>
    %29 = vector.broadcast %28 : vector<1x32xf32> to vector<8x32xf32>
    %30 = arith.addf %27, %29 : vector<8x32xf32>
    %31 = arith.negf %30 : vector<8x32xf32>
    %32 = math.exp %31 : vector<8x32xf32>
    %cst_22 = arith.constant 1.000000e+00 : f32
    %33 = vector.broadcast %cst_22 : f32 to vector<8x32xf32>
    %34 = arith.addf %33, %32 : vector<8x32xf32>
    %35 = arith.divf %33, %34 : vector<8x32xf32>
    %c0_23 = arith.constant 0 : index
    %c0_24 = arith.constant 0 : index
    %36 = vector.load %arg10[%c0_23, %c0_24] : memref<32x32xf32, #tpu.memory_space<vmem>>, vector<32x32xf32>
    %cst_25 = arith.constant dense<0.000000e+00> : vector<8x32xf32>
    %37 = tpu.matmul %35, %36, %cst_25 {dimension_numbers = #tpu.dot_dimension_numbers<[1], [0], [0], [1], [0, 0, 1, 1], [], []>} : vector<8x32xf32>, vector<32x32xf32>, vector<8x32xf32> -> vector<8x32xf32>
    %c0_26 = arith.constant 0 : index
    %c0_27 = arith.constant 0 : index
    %38 = vector.load %arg11[%c0_26, %c0_27] : memref<1x32xf32, #tpu.memory_space<vmem>>, vector<1x32xf32>
    %39 = vector.broadcast %38 : vector<1x32xf32> to vector<8x32xf32>
    %40 = arith.addf %37, %39 : vector<8x32xf32>
    %41 = arith.negf %40 : vector<8x32xf32>
    %42 = math.exp %41 : vector<8x32xf32>
    %cst_28 = arith.constant 1.000000e+00 : f32
    %43 = vector.broadcast %cst_28 : f32 to vector<8x32xf32>
    %44 = arith.addf %43, %42 : vector<8x32xf32>
    %45 = arith.divf %43, %44 : vector<8x32xf32>
    %c0_29 = arith.constant 0 : index
    %c0_30 = arith.constant 0 : index
    %46 = vector.load %arg12[%c0_29, %c0_30] : memref<32x32xf32, #tpu.memory_space<vmem>>, vector<32x32xf32>
    %cst_31 = arith.constant dense<0.000000e+00> : vector<8x32xf32>
    %47 = tpu.matmul %45, %46, %cst_31 {dimension_numbers = #tpu.dot_dimension_numbers<[1], [0], [0], [1], [0, 0, 1, 1], [], []>} : vector<8x32xf32>, vector<32x32xf32>, vector<8x32xf32> -> vector<8x32xf32>
    %c0_32 = arith.constant 0 : index
    %c0_33 = arith.constant 0 : index
    %48 = vector.load %arg13[%c0_32, %c0_33] : memref<1x32xf32, #tpu.memory_space<vmem>>, vector<1x32xf32>
    %49 = vector.broadcast %48 : vector<1x32xf32> to vector<8x32xf32>
    %50 = arith.addf %47, %49 : vector<8x32xf32>
    %c0_34 = arith.constant 0 : index
    %c0_35 = arith.constant 0 : index
    %51 = vector.load %arg14[%c0_34, %c0_35] : memref<32x12xf32, #tpu.memory_space<vmem>>, vector<32x12xf32>
    %cst_36 = arith.constant dense<0.000000e+00> : vector<8x12xf32>
    %52 = tpu.matmul %50, %51, %cst_36 {dimension_numbers = #tpu.dot_dimension_numbers<[1], [0], [0], [1], [0, 0, 1, 1], [], []>} : vector<8x32xf32>, vector<32x12xf32>, vector<8x12xf32> -> vector<8x12xf32>
    %c0_37 = arith.constant 0 : index
    %c0_38 = arith.constant 0 : index
    %53 = vector.load %arg15[%c0_37, %c0_38] : memref<1x12xf32, #tpu.memory_space<vmem>>, vector<1x12xf32>
    %54 = vector.broadcast %53 : vector<1x12xf32> to vector<8x12xf32>
    %55 = arith.addf %52, %54 : vector<8x12xf32>
    %c0_39 = arith.constant 0 : index
    %c0_40 = arith.constant 0 : index
    %56 = vector.load %arg16[%c0_39, %c0_40] : memref<8x12xf32, #tpu.memory_space<vmem>>, vector<8x12xf32>
    tpu.vector_store %arg16[%c0_39, %c0_40], %55 {strides = array<i32>} : memref<8x12xf32, #tpu.memory_space<vmem>>, vector<8x12xf32>,
    return
  }
  func.func @transform_0(%arg0: i32) -> (i32, i32) {
    %c0_i32 = arith.constant 0 : i32
    %c0_i32_0 = arith.constant 0 : i32
    return %arg0, %c0_i32 : i32, i32
  }
  func.func @transform_1(%arg0: i32) -> (i32, i32) {
    %c0_i32 = arith.constant 0 : i32
    %c0_i32_0 = arith.constant 0 : i32
    %c0_i32_1 = arith.constant 0 : i32
    return %c0_i32, %c0_i32_0 : i32, i32
  }
  func.func @transform_2(%arg0: i32) -> (i32, i32) {
    %c0_i32 = arith.constant 0 : i32
    %c0_i32_0 = arith.constant 0 : i32
    %c0_i32_1 = arith.constant 0 : i32
    return %c0_i32, %c0_i32_0 : i32, i32
  }
  func.func @transform_3(%arg0: i32) -> (i32, i32) {
    %c0_i32 = arith.constant 0 : i32
    %c0_i32_0 = arith.constant 0 : i32
    %c0_i32_1 = arith.constant 0 : i32
    return %c0_i32, %c0_i32_0 : i32, i32
  }
  func.func @transform_4(%arg0: i32) -> (i32, i32) {
    %c0_i32 = arith.constant 0 : i32
    %c0_i32_0 = arith.constant 0 : i32
    %c0_i32_1 = arith.constant 0 : i32
    return %c0_i32, %c0_i32_0 : i32, i32
  }
  func.func @transform_5(%arg0: i32) -> (i32, i32) {
    %c0_i32 = arith.constant 0 : i32
    %c0_i32_0 = arith.constant 0 : i32
    %c0_i32_1 = arith.constant 0 : i32
    return %c0_i32, %c0_i32_0 : i32, i32
  }
  func.func @transform_6(%arg0: i32) -> (i32, i32) {
    %c0_i32 = arith.constant 0 : i32
    %c0_i32_0 = arith.constant 0 : i32
    %c0_i32_1 = arith.constant 0 : i32
    return %c0_i32, %c0_i32_0 : i32, i32
  }
  func.func @transform_7(%arg0: i32) -> (i32, i32) {
    %c0_i32 = arith.constant 0 : i32
    %c0_i32_0 = arith.constant 0 : i32
    %c0_i32_1 = arith.constant 0 : i32
    return %c0_i32, %c0_i32_0 : i32, i32
  }
  func.func @transform_8(%arg0: i32) -> (i32, i32) {
    %c0_i32 = arith.constant 0 : i32
    %c0_i32_0 = arith.constant 0 : i32
    %c0_i32_1 = arith.constant 0 : i32
    return %c0_i32, %c0_i32_0 : i32, i32
  }
  func.func @transform_9(%arg0: i32) -> (i32, i32) {
    %c0_i32 = arith.constant 0 : i32
    %c0_i32_0 = arith.constant 0 : i32
    %c0_i32_1 = arith.constant 0 : i32
    return %c0_i32, %c0_i32_0 : i32, i32
  }
  func.func @transform_10(%arg0: i32) -> (i32, i32) {
    %c0_i32 = arith.constant 0 : i32
    %c0_i32_0 = arith.constant 0 : i32
    %c0_i32_1 = arith.constant 0 : i32
    return %c0_i32, %c0_i32_0 : i32, i32
  }
  func.func @transform_11(%arg0: i32) -> (i32, i32) {
    %c0_i32 = arith.constant 0 : i32
    %c0_i32_0 = arith.constant 0 : i32
    %c0_i32_1 = arith.constant 0 : i32
    return %c0_i32, %c0_i32_0 : i32, i32
  }
  func.func @transform_12(%arg0: i32) -> (i32, i32) {
    %c0_i32 = arith.constant 0 : i32
    %c0_i32_0 = arith.constant 0 : i32
    %c0_i32_1 = arith.constant 0 : i32
    return %c0_i32, %c0_i32_0 : i32, i32
  }
  func.func @transform_13(%arg0: i32) -> (i32, i32) {
    %c0_i32 = arith.constant 0 : i32
    %c0_i32_0 = arith.constant 0 : i32
    %c0_i32_1 = arith.constant 0 : i32
    return %c0_i32, %c0_i32_0 : i32, i32
  }
  func.func @transform_14(%arg0: i32) -> (i32, i32) {
    %c0_i32 = arith.constant 0 : i32
    %c0_i32_0 = arith.constant 0 : i32
    %c0_i32_1 = arith.constant 0 : i32
    return %c0_i32, %c0_i32_0 : i32, i32
  }
  func.func @transform_15(%arg0: i32) -> (i32, i32) {
    %c0_i32 = arith.constant 0 : i32
    %c0_i32_0 = arith.constant 0 : i32
    return %arg0, %c0_i32 : i32, i32
  }
}

</mosaic_0001>

<llo_original>
// kernel: multi_autoencoder_forward.1
$region0: #{multi_autoencoder_forward.1}
  #allocation0 [shape = 'u32[]', space=smem, size = 0x4, offset = 0x4, fixed_abs, tag = 'smem constant byte address 0x4 - core index']
  #allocation1 [shape = 'u32[72,128]{1,0:T(1,128)}', space=vmem, size = 0x9000, scoped, tag = 'internal scratch']
  %s0 = inlined_call_operand.vmem [shape: f32[8,8], index: 0, kind: input, shape index: {}]
  %s1 = inlined_call_operand.vmem [shape: f32[8,64], index: 1, kind: input, shape index: {}]
  %s2 = inlined_call_operand.vmem [shape: f32[1,64], index: 2, kind: input, shape index: {}]
  %s3 = inlined_call_operand.vmem [shape: f32[64,64], index: 3, kind: input, shape index: {}]
  %s4 = inlined_call_operand.vmem [shape: f32[1,64], index: 4, kind: input, shape index: {}]
  %s5 = inlined_call_operand.hbm [shape: f32[64,64], index: 5, kind: input, shape index: {}]
  %s6 = inlined_call_operand.vmem [shape: f32[1,64], index: 6, kind: input, shape index: {}]
  %s7 = inlined_call_operand.vmem [shape: f32[32,32], index: 7, kind: input, shape index: {}]
  %s8 = inlined_call_operand.vmem [shape: f32[1,32], index: 8, kind: input, shape index: {}]
  %s9 = inlined_call_operand.hbm [shape: f32[32,32], index: 9, kind: input, shape index: {}]
  %s10 = inlined_call_operand.vmem [shape: f32[1,32], index: 10, kind: input, shape index: {}]
  %s11 = inlined_call_operand.hbm [shape: f32[32,32], index: 11, kind: input, shape index: {}]
  %s12 = inlined_call_operand.vmem [shape: f32[1,32], index: 12, kind: input, shape index: {}]
  %s13 = inlined_call_operand.vmem [shape: f32[32,12], index: 13, kind: input, shape index: {}]
  %s14 = inlined_call_operand.vmem [shape: f32[1,12], index: 14, kind: input, shape index: {}]
  %s15 = inlined_call_operand.vmem [shape: f32[8,12], index: 15, kind: output, shape index: {}]
  %s16 = sld [smem:[#allocation0]]
  $region82: #{multi_autoencoder_forward.1} parent=0
    _
  %s18 = ssub.s32 1, %s16
  %s19 = scalar_select 0, %s18, %s16
  $region1: #{multi_autoencoder_forward.1} parent=0
    #allocation2 [shape = 'u8[32768]{0}', space=vmem, size = 0x8000, scoped, tag = 'input window, operand 5, single buffered']
    #allocation3 [shape = 's32[1]{0}', space=sflag, size = 0x4, scoped, tag = 'scoped memory for multi_autoencoder_forward.1']
    #allocation4 [shape = 'u8[16384]{0}', space=vmem, size = 0x4000, scoped, tag = 'input window, operand 9, single buffered']
    #allocation5 [shape = 's32[1]{0}', space=sflag, size = 0x4, scoped, tag = 'scoped memory for multi_autoencoder_forward.1']
    #allocation6 [shape = 'u8[16384]{0}', space=vmem, size = 0x4000, scoped, tag = 'input window, operand 11, single buffered']
    %20 = vsyncpa [#allocation3], 0
    %21 = vsyncpa [#allocation5], 0
    // Predicated region
    $region2: #{multi_autoencoder_forward.1} parent=1 // pred_check
      _
    $region3: #{multi_autoencoder_forward.1} parent=1 // pred_check_branch
      %23 = sbr.rel (0) target = $region5
    $region4: #{multi_autoencoder_forward.1} parent=1 // pred_region
      _
    $region5: #{multi_autoencoder_forward.1} parent=1 // pred_fallthru
      _
    // Predicated region
    $region6: #{multi_autoencoder_forward.1} parent=1 // pred_check
      _
    $region7: #{multi_autoencoder_forward.1} parent=1 // pred_check_branch
      %25 = sbr.rel (0) target = $region9
    $region8: #{multi_autoencoder_forward.1} parent=1 // pred_region
      _
    $region9: #{multi_autoencoder_forward.1} parent=1 // pred_fallthru
      _
    // Predicated region
    $region10: #{multi_autoencoder_forward.1} parent=1 // pred_check
      _
    $region11: #{multi_autoencoder_forward.1} parent=1 // pred_check_branch
      %27 = sbr.rel (0) target = $region13
    $region12: #{multi_autoencoder_forward.1} parent=1 // pred_region
      _
    $region13: #{multi_autoencoder_forward.1} parent=1 // pred_fallthru
      _
    // Predicated region
    $region14: #{multi_autoencoder_forward.1} parent=1 // pred_check
      _
    $region15: #{multi_autoencoder_forward.1} parent=1 // pred_check_branch
      %29 = sbr.rel (0) target = $region17
    $region16: #{multi_autoencoder_forward.1} parent=1 // pred_region
      _
    $region17: #{multi_autoencoder_forward.1} parent=1 // pred_fallthru
      _
    // Predicated region
    $region18: #{multi_autoencoder_forward.1} parent=1 // pred_check
      _
    $region19: #{multi_autoencoder_forward.1} parent=1 // pred_check_branch
      %31 = sbr.rel (0) target = $region21
    $region20: #{multi_autoencoder_forward.1} parent=1 // pred_region
      _
    $region21: #{multi_autoencoder_forward.1} parent=1 // pred_fallthru
      _
    // Predicated region
    $region22: #{multi_autoencoder_forward.1} parent=1 // pred_check
      _
    $region23: #{multi_autoencoder_forward.1} parent=1 // pred_check_branch
      %33 = sbr.rel (0) target = $region25
    $region24: #{multi_autoencoder_forward.1} parent=1 // pred_region
      %35 = vsyncadd [#allocation3], 0
      %s36 = sshll.u32 %s5, 4
      %s37 = int_to_ptr.hbm [resolvable:$true] %s36
      %s38 = sshll.u32 [#allocation2], 4
      %s39 = int_to_ptr.vmem [resolvable:$true] %s38
      %44 = dma.hbm_to_vmem [thread:$0]  %s37, 1024, %s39, [#allocation3], 128, 128, 8
    $region25: #{multi_autoencoder_forward.1} parent=1 // pred_fallthru
      _
    // Predicated region
    $region26: #{multi_autoencoder_forward.1} parent=1 // pred_check
      _
    $region27: #{multi_autoencoder_forward.1} parent=1 // pred_check_branch
      %46 = sbr.rel (0) target = $region29
    $region28: #{multi_autoencoder_forward.1} parent=1 // pred_region
      _
    $region29: #{multi_autoencoder_forward.1} parent=1 // pred_fallthru
      _
    // Predicated region
    $region30: #{multi_autoencoder_forward.1} parent=1 // pred_check
      _
    $region31: #{multi_autoencoder_forward.1} parent=1 // pred_check_branch
      %48 = sbr.rel (0) target = $region33
    $region32: #{multi_autoencoder_forward.1} parent=1 // pred_region
      _
    $region33: #{multi_autoencoder_forward.1} parent=1 // pred_fallthru
      _
    // Predicated region
    $region34: #{multi_autoencoder_forward.1} parent=1 // pred_check
      _
    $region35: #{multi_autoencoder_forward.1} parent=1 // pred_check_branch
      %50 = sbr.rel (0) target = $region37
    $region36: #{multi_autoencoder_forward.1} parent=1 // pred_region
      _
    $region37: #{multi_autoencoder_forward.1} parent=1 // pred_fallthru
      _
    // Predicated region
    $region38: #{multi_autoencoder_forward.1} parent=1 // pred_check
      _
    $region39: #{multi_autoencoder_forward.1} parent=1 // pred_check_branch
      %52 = sbr.rel (0) target = $region41
    $region40: #{multi_autoencoder_forward.1} parent=1 // pred_region
      %54 = vsyncadd [#allocation5], 0
      %s55 = sshll.u32 %s9, 4
      %s56 = int_to_ptr.hbm [resolvable:$true] %s55
      %s57 = sshll.u32 [#allocation4], 4
      %s58 = int_to_ptr.vmem [resolvable:$true] %s57
      %63 = dma.hbm_to_vmem [thread:$0]  %s56, 512, %s58, [#allocation5], 128, 128, 8
    $region41: #{multi_autoencoder_forward.1} parent=1 // pred_fallthru
      _
    // Predicated region
    $region42: #{multi_autoencoder_forward.1} parent=1 // pred_check
      _
    $region43: #{multi_autoencoder_forward.1} parent=1 // pred_check_branch
      %65 = sbr.rel (0) target = $region45
    $region44: #{multi_autoencoder_forward.1} parent=1 // pred_region
      _
    $region45: #{multi_autoencoder_forward.1} parent=1 // pred_fallthru
      _
    // Predicated region
    $region46: #{multi_autoencoder_forward.1} parent=1 // pred_check
      _
    $region47: #{multi_autoencoder_forward.1} parent=1 // pred_check_branch
      %67 = sbr.rel (0) target = $region49
    $region48: #{multi_autoencoder_forward.1} parent=1 // pred_region
      %69 = vsyncadd [#allocation5], 0
      %s70 = sshll.u32 %s11, 4
      %s71 = int_to_ptr.hbm [resolvable:$true] %s70
      %s72 = sshll.u32 [#allocation6], 4
      %s73 = int_to_ptr.vmem [resolvable:$true] %s72
      %78 = dma.hbm_to_vmem [thread:$0]  %s71, 512, %s73, [#allocation5], 128, 128, 8
    $region49: #{multi_autoencoder_forward.1} parent=1 // pred_fallthru
      _
    // Predicated region
    $region50: #{multi_autoencoder_forward.1} parent=1 // pred_check
      _
    $region51: #{multi_autoencoder_forward.1} parent=1 // pred_check_branch
      %80 = sbr.rel (0) target = $region53
    $region52: #{multi_autoencoder_forward.1} parent=1 // pred_region
      _
    $region53: #{multi_autoencoder_forward.1} parent=1 // pred_fallthru
      _
    // Predicated region
    $region54: #{multi_autoencoder_forward.1} parent=1 // pred_check
      _
    $region55: #{multi_autoencoder_forward.1} parent=1 // pred_check_branch
      %82 = sbr.rel (0) target = $region57
    $region56: #{multi_autoencoder_forward.1} parent=1 // pred_region
      _
    $region57: #{multi_autoencoder_forward.1} parent=1 // pred_fallthru
      _
    // Predicated region
    $region58: #{multi_autoencoder_forward.1} parent=1 // pred_check
      _
    $region59: #{multi_autoencoder_forward.1} parent=1 // pred_check_branch
      %84 = sbr.rel (0) target = $region61
    $region60: #{multi_autoencoder_forward.1} parent=1 // pred_region
      _
    $region61: #{multi_autoencoder_forward.1} parent=1 // pred_fallthru
      _
    // Predicated region
    $region62: #{multi_autoencoder_forward.1} parent=1 // pred_check
      _
    $region63: #{multi_autoencoder_forward.1} parent=1 // pred_check_branch
      %86 = sbr.rel (0) target = $region65
    $region64: #{multi_autoencoder_forward.1} parent=1 // pred_region
      %88 = dma.done [#allocation3], 1024
    $region65: #{multi_autoencoder_forward.1} parent=1 // pred_fallthru
      _
    // Predicated region
    $region66: #{multi_autoencoder_forward.1} parent=1 // pred_check
      _
    $region67: #{multi_autoencoder_forward.1} parent=1 // pred_check_branch
      %90 = sbr.rel (0) target = $region69
    $region68: #{multi_autoencoder_forward.1} parent=1 // pred_region
      %92 = dma.done [#allocation5], 512
    $region69: #{multi_autoencoder_forward.1} parent=1 // pred_fallthru
      _
    // Predicated region
    $region70: #{multi_autoencoder_forward.1} parent=1 // pred_check
      _
    $region71: #{multi_autoencoder_forward.1} parent=1 // pred_check_branch
      %94 = sbr.rel (0) target = $region73
    $region72: #{multi_autoencoder_forward.1} parent=1 // pred_region
      %96 = dma.done [#allocation5], 512
    $region73: #{multi_autoencoder_forward.1} parent=1 // pred_fallthru
      _
    %v97 = vld [vmem:[%s0] sm:$0xff]
    %v98 = vld [vmem:[%s1] sm:$0xff]
    %v99 = vld [vmem:[%s2] sm:$0x1]
    %v101 = vperm.slane %v99, 0
    %vm103 = vcmask 64512
    %v105 = vsel %vm103, %v97, 0
    %107 = vmatpush.msra.mxu0 0.0
    %108 = vmatpush.msra.mxu0 0.0
    %109 = vmatpush.msra.mxu0 0.0
    %110 = vmatpush.msra.mxu0 0.0
    %111 = vmatpush.msra.mxu0 0.0
    %112 = vmatpush.msra.mxu0 0.0
    %113 = vmatpush.msra.mxu0 0.0
    %114 = vmatpush.msra.mxu0 0.0
    %115 = vmatpush.msra.mxu0 0.0
    %116 = vmatpush.msra.mxu0 0.0
    %117 = vmatpush.msra.mxu0 0.0
    %118 = vmatpush.msra.mxu0 0.0
    %119 = vmatpush.msra.mxu0 0.0
    %120 = vmatpush.msra.mxu0 0.0
    %121 = vmatpush.msra.mxu0 0.0
    %122 = vmatpush.msra.mxu0 %v98
    %123 = vmatmul.f32.gmra.mxu0 %v105
    %v124 = vpop.f32.mrf.mxu0
    %v125 = vadd.f32 %v101, %v124
    %126 = vdwg.mxu0
    %v127 = vxor.u32 %v125, 2147483648
    %v128 = vmul.f32 %v127, 1.442695
    %v129 = vpow.pop %v128
    %v130 = vadd.f32 %v129, 1.0
    %v131 = vrcp.pop %v130
    %v132 = vmul.f32 %v130, %v131
    %v133 = vsub.f32 1.0, %v132
    %v134 = vmul.f32 %v131, %v133
    %v135 = vadd.f32 %v131, %v134
    %vm136 = vweird.f32 %v130
    %vm137 = vweird.f32 %v131
    %vm138 = vmor %vm136, %vm137
    %v139 = vsel %vm138, %v131, %v135
    %v140 = vand.u32 2147483647, %v130
    %vm141 = vcmp.eq.f32.partialorder %v140, 8.507059e+37
    %v142 = vand.u32 %v130, 2147483648
    %v143 = vor.u32 1.1754944e-38, %v142
    %v144 = vsel %vm141, %v143, %v139
    %v145 = vmul.f32 1.0, %v144
    %v146 = vld [vmem:[%s3] sm:$0xff]
    %v147 = vld [vmem:[%s3 + $0x8] sm:$0xff]
    %v148 = vld [vmem:[%s3 + $0x10] sm:$0xff]
    %v149 = vld [vmem:[%s3 + $0x18] sm:$0xff]
    %v150 = vld [vmem:[%s3 + $0x20] sm:$0xff]
    %v151 = vld [vmem:[%s3 + $0x28] sm:$0xff]
    %v152 = vld [vmem:[%s3 + $0x30] sm:$0xff]
    %v153 = vld [vmem:[%s3 + $0x38] sm:$0xff]
    %v154 = vld [vmem:[%s4] sm:$0x1]
    %v156 = vperm.slane %v154, 0
    %vm158 = vcmask 523264
    %v160 = vsel %vm158, %v145, 0
    %162 = vmatpush.msra.mxu0 0.0
    %163 = vmatpush.msra.mxu0 0.0
    %164 = vmatpush.msra.mxu0 0.0
    %165 = vmatpush.msra.mxu0 0.0
    %166 = vmatpush.msra.mxu0 0.0
    %167 = vmatpush.msra.mxu0 0.0
    %168 = vmatpush.msra.mxu0 0.0
    %169 = vmatpush.msra.mxu0 0.0
    %170 = vmatpush.msra.mxu0 %v153
    %171 = vmatpush.msra.mxu0 %v152
    %172 = vmatpush.msra.mxu0 %v151
    %173 = vmatpush.msra.mxu0 %v150
    %174 = vmatpush.msra.mxu0 %v149
    %175 = vmatpush.msra.mxu0 %v148
    %176 = vmatpush.msra.mxu0 %v147
    %177 = vmatpush.msra.mxu0 %v146
    %178 = vmatmul.f32.gmra.mxu0 %v160
    %v179 = vpop.f32.mrf.mxu0
    %v180 = vadd.f32 %v156, %v179
    %181 = vdwg.mxu0
    %v182 = vmax.f32 %v180, 0.0
    %v183 = vld [vmem:[#allocation2] sm:$0xff]
    %v184 = vld [vmem:[#allocation2 + $0x8] sm:$0xff]
    %v185 = vld [vmem:[#allocation2 + $0x10] sm:$0xff]
    %v186 = vld [vmem:[#allocation2 + $0x18] sm:$0xff]
    %v187 = vld [vmem:[#allocation2 + $0x20] sm:$0xff]
    %v188 = vld [vmem:[#allocation2 + $0x28] sm:$0xff]
    %v189 = vld [vmem:[#allocation2 + $0x30] sm:$0xff]
    %v190 = vld [vmem:[#allocation2 + $0x38] sm:$0xff]
    %v191 = vld [vmem:[%s6] sm:$0x1]
    %v193 = vperm.slane %v191, 0
    %v196 = vsel %vm158, %v182, 0
    %198 = vmatpush.msra.mxu0 0.0
    %199 = vmatpush.msra.mxu0 0.0
    %200 = vmatpush.msra.mxu0 0.0
    %201 = vmatpush.msra.mxu0 0.0
    %202 = vmatpush.msra.mxu0 0.0
    %203 = vmatpush.msra.mxu0 0.0
    %204 = vmatpush.msra.mxu0 0.0
    %205 = vmatpush.msra.mxu0 0.0
    %206 = vmatpush.msra.mxu0 %v190
    %207 = vmatpush.msra.mxu0 %v189
    %208 = vmatpush.msra.mxu0 %v188
    %209 = vmatpush.msra.mxu0 %v187
    %210 = vmatpush.msra.mxu0 %v186
    %211 = vmatpush.msra.mxu0 %v185
    %212 = vmatpush.msra.mxu0 %v184
    %213 = vmatpush.msra.mxu0 %v183
    %214 = vmatmul.f32.gmra.mxu0 %v196
    %v215 = vpop.f32.mrf.mxu0
    %v216 = vadd.f32 %v193, %v215
    %217 = vdwg.mxu0
    %219 = vrot.lane.b32.xlu0 %v216, 96
    %v220 = vpop.permute.xlu0 %219
    %v222 = vmax.f32 %v216, %v220
    %v223 = vld [vmem:[%s7] sm:$0xff]
    %v224 = vld [vmem:[%s7 + $0x8] sm:$0xff]
    %v225 = vld [vmem:[%s7 + $0x10] sm:$0xff]
    %v226 = vld [vmem:[%s7 + $0x18] sm:$0xff]
    %v227 = vld [vmem:[%s8] sm:$0x1]
    %v229 = vperm.slane %v227, 0
    %vm231 = vcmask 261120
    %v233 = vsel %vm231, %v222, 0
    %235 = vmatpush.msra.mxu0 0.0
    %236 = vmatpush.msra.mxu0 0.0
    %237 = vmatpush.msra.mxu0 0.0
    %238 = vmatpush.msra.mxu0 0.0
    %239 = vmatpush.msra.mxu0 0.0
    %240 = vmatpush.msra.mxu0 0.0
    %241 = vmatpush.msra.mxu0 0.0
    %242 = vmatpush.msra.mxu0 0.0
    %243 = vmatpush.msra.mxu0 0.0
    %244 = vmatpush.msra.mxu0 0.0
    %245 = vmatpush.msra.mxu0 0.0
    %246 = vmatpush.msra.mxu0 0.0
    %247 = vmatpush.msra.mxu0 %v226
    %248 = vmatpush.msra.mxu0 %v225
    %249 = vmatpush.msra.mxu0 %v224
    %250 = vmatpush.msra.mxu0 %v223
    %251 = vmatmul.f32.gmra.mxu0 %v233
    %v252 = vpop.f32.mrf.mxu0
    %v253 = vadd.f32 %v229, %v252
    %254 = vdwg.mxu0
    %v255 = vxor.u32 %v253, 2147483648
    %v256 = vmul.f32 %v255, 1.442695
    %v257 = vpow.pop %v256
    %v258 = vadd.f32 %v257, 1.0
    %v259 = vrcp.pop %v258
    %v260 = vmul.f32 %v258, %v259
    %v261 = vsub.f32 1.0, %v260
    %v262 = vmul.f32 %v259, %v261
    %v263 = vadd.f32 %v259, %v262
    %vm264 = vweird.f32 %v258
    %vm265 = vweird.f32 %v259
    %vm266 = vmor %vm264, %vm265
    %v267 = vsel %vm266, %v259, %v263
    %v268 = vand.u32 2147483647, %v258
    %vm269 = vcmp.eq.f32.partialorder %v268, 8.507059e+37
    %v270 = vand.u32 %v258, 2147483648
    %v271 = vor.u32 1.1754944e-38, %v270
    %v272 = vsel %vm269, %v271, %v267
    %v273 = vmul.f32 1.0, %v272
    %v274 = vld [vmem:[#allocation4] sm:$0xff]
    %v275 = vld [vmem:[#allocation4 + $0x8] sm:$0xff]
    %v276 = vld [vmem:[#allocation4 + $0x10] sm:$0xff]
    %v277 = vld [vmem:[#allocation4 + $0x18] sm:$0xff]
    %v278 = vld [vmem:[%s10] sm:$0x1]
    %v280 = vperm.slane %v278, 0
    %v283 = vsel %vm231, %v273, 0
    %285 = vmatpush.msra.mxu0 0.0
    %286 = vmatpush.msra.mxu0 0.0
    %287 = vmatpush.msra.mxu0 0.0
    %288 = vmatpush.msra.mxu0 0.0
    %289 = vmatpush.msra.mxu0 0.0
    %290 = vmatpush.msra.mxu0 0.0
    %291 = vmatpush.msra.mxu0 0.0
    %292 = vmatpush.msra.mxu0 0.0
    %293 = vmatpush.msra.mxu0 0.0
    %294 = vmatpush.msra.mxu0 0.0
    %295 = vmatpush.msra.mxu0 0.0
    %296 = vmatpush.msra.mxu0 0.0
    %297 = vmatpush.msra.mxu0 %v277
    %298 = vmatpush.msra.mxu0 %v276
    %299 = vmatpush.msra.mxu0 %v275
    %300 = vmatpush.msra.mxu0 %v274
    %301 = vmatmul.f32.gmra.mxu0 %v283
    %v302 = vpop.f32.mrf.mxu0
    %v303 = vadd.f32 %v280, %v302
    %304 = vdwg.mxu0
    %v305 = vxor.u32 %v303, 2147483648
    %v306 = vmul.f32 %v305, 1.442695
    %v307 = vpow.pop %v306
    %v308 = vadd.f32 %v307, 1.0
    %v309 = vrcp.pop %v308
    %v310 = vmul.f32 %v308, %v309
    %v311 = vsub.f32 1.0, %v310
    %v312 = vmul.f32 %v309, %v311
    %v313 = vadd.f32 %v309, %v312
    %vm314 = vweird.f32 %v308
    %vm315 = vweird.f32 %v309
    %vm316 = vmor %vm314, %vm315
    %v317 = vsel %vm316, %v309, %v313
    %v318 = vand.u32 2147483647, %v308
    %vm319 = vcmp.eq.f32.partialorder %v318, 8.507059e+37
    %v320 = vand.u32 %v308, 2147483648
    %v321 = vor.u32 1.1754944e-38, %v320
    %v322 = vsel %vm319, %v321, %v317
    %v323 = vmul.f32 1.0, %v322
    %v324 = vld [vmem:[#allocation6] sm:$0xff]
    %v325 = vld [vmem:[#allocation6 + $0x8] sm:$0xff]
    %v326 = vld [vmem:[#allocation6 + $0x10] sm:$0xff]
    %v327 = vld [vmem:[#allocation6 + $0x18] sm:$0xff]
    %v328 = vld [vmem:[%s12] sm:$0x1]
    %v330 = vperm.slane %v328, 0
    %v333 = vsel %vm231, %v323, 0
    %335 = vmatpush.msra.mxu0 0.0
    %336 = vmatpush.msra.mxu0 0.0
    %337 = vmatpush.msra.mxu0 0.0
    %338 = vmatpush.msra.mxu0 0.0
    %339 = vmatpush.msra.mxu0 0.0
    %340 = vmatpush.msra.mxu0 0.0
    %341 = vmatpush.msra.mxu0 0.0
    %342 = vmatpush.msra.mxu0 0.0
    %343 = vmatpush.msra.mxu0 0.0
    %344 = vmatpush.msra.mxu0 0.0
    %345 = vmatpush.msra.mxu0 0.0
    %346 = vmatpush.msra.mxu0 0.0
    %347 = vmatpush.msra.mxu0 %v327
    %348 = vmatpush.msra.mxu0 %v326
    %349 = vmatpush.msra.mxu0 %v325
    %350 = vmatpush.msra.mxu0 %v324
    %351 = vmatmul.f32.gmra.mxu0 %v333
    %v352 = vpop.f32.mrf.mxu0
    %v353 = vadd.f32 %v330, %v352
    %354 = vdwg.mxu0
    %v355 = vld [vmem:[%s13] sm:$0xff]
    %v356 = vld [vmem:[%s13 + $0x8] sm:$0xff]
    %v357 = vld [vmem:[%s13 + $0x10] sm:$0xff]
    %v358 = vld [vmem:[%s13 + $0x18] sm:$0xff]
    %v359 = vld [vmem:[%s14] sm:$0x1]
    %v361 = vperm.slane %v359, 0
    %v364 = vsel %vm231, %v353, 0
    %366 = vmatpush.msra.mxu0 0.0
    %367 = vmatpush.msra.mxu0 0.0
    %368 = vmatpush.msra.mxu0 0.0
    %369 = vmatpush.msra.mxu0 0.0
    %370 = vmatpush.msra.mxu0 0.0
    %371 = vmatpush.msra.mxu0 0.0
    %372 = vmatpush.msra.mxu0 0.0
    %373 = vmatpush.msra.mxu0 0.0
    %374 = vmatpush.msra.mxu0 0.0
    %375 = vmatpush.msra.mxu0 0.0
    %376 = vmatpush.msra.mxu0 0.0
    %377 = vmatpush.msra.mxu0 0.0
    %378 = vmatpush.msra.mxu0 %v358
    %379 = vmatpush.msra.mxu0 %v357
    %380 = vmatpush.msra.mxu0 %v356
    %381 = vmatpush.msra.mxu0 %v355
    %382 = vmatmul.f32.gmra.mxu0 %v364
    %v383 = vpop.f32.mrf.mxu0
    %v384 = vadd.f32 %v361, %v383
    %385 = vdwg.mxu0
    %vm386 = vcmask 97280
    %387 = vst.msk [vmem:[%s15] sm:$0xff] %vm386, %v384
    // Predicated region
    $region74: #{multi_autoencoder_forward.1} parent=1 // pred_check
      _
    $region75: #{multi_autoencoder_forward.1} parent=1 // pred_check_branch
      %389 = sbr.rel (0) target = $region77
    $region76: #{multi_autoencoder_forward.1} parent=1 // pred_region
      _
    $region77: #{multi_autoencoder_forward.1} parent=1 // pred_fallthru
      _
    // Predicated region
    $region78: #{multi_autoencoder_forward.1} parent=1 // pred_check
      _
    $region79: #{multi_autoencoder_forward.1} parent=1 // pred_check_branch
      %391 = sbr.rel (0) target = $region81
    $region80: #{multi_autoencoder_forward.1} parent=1 // pred_region
      _
    $region81: #{multi_autoencoder_forward.1} parent=1 // pred_fallthru
      _
    %392 = vsyncpa [#allocation3], 1
    %393 = vsyncpa [#allocation5], 1

</llo_original>
